<compile_context>
chip_gen: v7x
topology: tpu7x:2x2x1
jax: 0.10.0
libtpu: 0.0.40
codegen_flags: <defaults>
</compile_context>

<pallas_src>
import functools

import jax
import jax.numpy as jnp
from jax import lax
from jax.experimental import pallas as pl
from jax.experimental.pallas import tpu as pltpu


def _round_up(x, m):
    return (x + m - 1) // m * m


def _conv_bn_stats_kernel(x_ref, w_ref, y_ref, s1_ref, s2_ref, *,
                          slope, th, wo, n_t, ho, needs_mask):
    """(Leaky)ReLU + 4x4/s2 conv (4 shifted 2x2/s1 MXU dots) + BN sum / sum-sq."""
    c = pl.program_id(0)              # "parallel" axis: per-core stats split
    g = pl.program_id(1)              # "arbitrary" axis: row tiles, stats accumulate
    g_half = pl.num_programs(1)

    coutp = y_ref.shape[-1]

    # (Leaky)ReLU in f32 over the (th+1, Wo+1, 4*Cin) window, back to bf16 for
    # the MXU.  Conv zero padding / zero fill rows stay zero under (leaky)relu.
    win = x_ref[0].astype(jnp.float32)
    win = jnp.where(win > 0, win, win * slope)
    win = win.astype(x_ref.dtype)
    k4 = win.shape[-1]

    # 4x4 stride-2 conv == sum over the 4 (a, b) shifts of a 2x2 stride-1 conv
    # on the space-to-depth input.
    acc = jnp.zeros((th * wo, coutp), jnp.float32)
    for ab in range(4):
        a, b = ab // 2, ab % 2
        v = win[a:a + th, b:b + wo, :].reshape(th * wo, k4)
        acc = acc + jnp.dot(v, w_ref[ab], preferred_element_type=jnp.float32)

    y_ref[...] = acc

    # Training-mode BatchNorm statistics, accumulated across the row-tile axis.
    if needs_mask:
        # mask out rows belonging to the zero-padded tail of the last tile
        tid = c * g_half + g
        valid = ho - (tid % n_t) * th
        row = lax.broadcasted_iota(jnp.int32, (th * wo, 1), 0) // wo
        acc = jnp.where(row < valid, acc, 0.0)

    @pl.when(g == 0)
    def _():
        s1_ref[...] = jnp.zeros_like(s1_ref)
        s2_ref[...] = jnp.zeros_like(s2_ref)

    s1_ref[...] += acc.reshape(-1, 8, coutp).sum(axis=0)
    s2_ref[...] += (acc * acc).reshape(-1, 8, coutp).sum(axis=0)


def _bn_apply_kernel(y_ref, scale_ref, shift_ref, o_ref):
    """Per-channel affine normalization: y * scale + shift (lane-dense)."""
    o_ref[...] = y_ref[...] * scale_ref[...] + shift_ref[...]


def block_unet_forward(x, weight, gamma=None, beta=None, *, prelu=0.0, bn=True,
                       eps=1e-5, tile_rows=None, compute_dtype=jnp.bfloat16):
    """blockUNet forward: (Leaky)ReLU -> Conv2d(4, 2, 1, bias=False) -> BatchNorm2d.

    NCHW in / NCHW out (PyTorch convention).
    # TODO(synk): transposed=True (ConvTranspose2d) and dropout>0 (Dropout2d)
    # configurations of blockUNet are not implemented here.
    # TODO(synk): for very large Cin*Cout on v7x (64 MiB VMEM), add a K grid
    # axis with an f32 accumulator instead of keeping the full weight resident.
    """
    N, Cin, H, W = x.shape
    Cout = weight.shape[0]
    assert weight.shape == (Cout, Cin, 4, 4), weight.shape
    assert H % 2 == 0 and W % 2 == 0, "even spatial dims expected (k=4, s=2, p=1)"
    Ho, Wo = H // 2, W // 2
    Hp2, Wp2 = Ho + 1, Wo + 1
    K4 = 4 * Cin

    # ---- host glue (all ~|x|-sized): NHWC once + pad + space-to-depth(2) ----
    xp = jnp.pad(x.transpose(0, 2, 3, 1), ((0, 0), (1, 1), (1, 1), (0, 0)))
    x_s2d = (xp.reshape(N, Hp2, 2, Wp2, 2, Cin)
               .transpose(0, 1, 3, 2, 4, 5)
               .reshape(N, Hp2, Wp2, K4)
               .astype(compute_dtype))

    # row tile: tile_m = th * Wo output rows per grid step (multiple of 8)
    if tile_rows is None:
        th = max(1, min(Ho, pl.cdiv(512, Wo)))
    else:
        th = max(1, int(tile_rows))
    while (th * Wo) % 8 != 0:
        th += 1
    n_t = pl.cdiv(Ho, th)

    # windowed view with a 1-row halo (out-of-range rows zero-filled)
    row_idx = jnp.arange(n_t)[:, None] * th + jnp.arange(th + 1)[None, :]
    x_win = jnp.take(x_s2d, row_idx, axis=1, mode="fill", fill_value=0)
    G = N * n_t                       # total row tiles
    G_half = pl.cdiv(G, 2)            # split tiles across 2 cores (v7x megacore)
    G_pad = 2 * G_half
    x_win = x_win.reshape(G, th + 1, Wp2, K4)
    if G_pad > G:
        x_win = jnp.pad(x_win, ((0, G_pad - G), (0, 0), (0, 0), (0, 0)))

    # weights: (Cout, Cin, 4, 4) -> (4 shifts, 4*Cin, Cout), Cout padded to 128*k
    Coutp = _round_up(Cout, 128)
    w = (weight.transpose(2, 3, 1, 0)            # (kh, kw, Cin, Cout)
               .reshape(2, 2, 2, 2, Cin, Cout)   # (a, i, b, j, Cin, Cout)
               .transpose(0, 2, 1, 3, 4, 5)      # (a, b, i, j, Cin, Cout)
               .reshape(4, K4, Cout))
    w = jnp.pad(w, ((0, 0), (0, 0), (0, Coutp - Cout))).astype(compute_dtype)

    tile_m = th * Wo
    Mp = G_pad * tile_m
    needs_mask = (Ho % th) != 0
    vmem_limit = 48 * 1024 * 1024

    conv_kernel = functools.partial(
        _conv_bn_stats_kernel, slope=float(prelu), th=th, wo=Wo,
        n_t=n_t, ho=Ho, needs_mask=needs_mask)

    # ---- kernel 1: (leaky)relu + conv + BN statistics ----------------------
    y, s1, s2 = pl.pallas_call(
        conv_kernel,
        out_shape=(
            jax.ShapeDtypeStruct((Mp, Coutp), jnp.float32),
            jax.ShapeDtypeStruct((16, Coutp), jnp.float32),
            jax.ShapeDtypeStruct((16, Coutp), jnp.float32),
        ),
        grid_spec=pltpu.PrefetchScalarGridSpec(
            num_scalar_prefetch=0,
            grid=(2, G_half),
            in_specs=[
                pl.BlockSpec((1, th + 1, Wp2, K4),
                             lambda c, g: (c * G_half + g, 0, 0, 0)),
                pl.BlockSpec((4, K4, Coutp), lambda c, g: (0, 0, 0)),
            ],
            out_specs=[
                pl.BlockSpec((tile_m, Coutp), lambda c, g: (c * G_half + g, 0)),
                pl.BlockSpec((8, Coutp), lambda c, g: (c, 0)),
                pl.BlockSpec((8, Coutp), lambda c, g: (c, 0)),
            ],
        ),
        compiler_params=pltpu.CompilerParams(
            dimension_semantics=("parallel", "arbitrary"),
            vmem_limit_bytes=vmem_limit),
    )(x_win, w)

    if bn:
        # tiny per-channel scalar math (glue); padded channels are all-zero.
        m_true = float(N * Ho * Wo)
        mean = s1.sum(axis=0) / m_true
        var = jnp.maximum(s2.sum(axis=0) / m_true - mean * mean, 0.0)
        gamma_p = jnp.pad(gamma.astype(jnp.float32), (0, Coutp - Cout))
        beta_p = jnp.pad(beta.astype(jnp.float32), (0, Coutp - Cout))
        scale = gamma_p * lax.rsqrt(var + eps)
        shift = beta_p - mean * scale

        # TODO(synk): when chaining blockUNet blocks, fuse this scale/shift into
        # the next block's conv kernel instead of re-reading y from HBM.
        out_flat = pl.pallas_call(
            _bn_apply_kernel,
            out_shape=jax.ShapeDtypeStruct((Mp, Coutp), jnp.float32),
            grid_spec=pltpu.PrefetchScalarGridSpec(
                num_scalar_prefetch=0,
                grid=(Mp // tile_m,),
                in_specs=[
                    pl.BlockSpec((tile_m, Coutp), lambda i: (i, 0)),
                    pl.BlockSpec((1, Coutp), lambda i: (0, 0)),
                    pl.BlockSpec((1, Coutp), lambda i: (0, 0)),
                ],
                out_specs=pl.BlockSpec((tile_m, Coutp), lambda i: (i, 0)),
            ),
            compiler_params=pltpu.CompilerParams(
                dimension_semantics=("parallel",),
                vmem_limit_bytes=vmem_limit),
            input_output_aliases={0: 0},
        )(y, scale.reshape(1, Coutp), shift.reshape(1, Coutp))
    else:
        out_flat = y

    out = (out_flat.reshape(G_pad, th, Wo, Coutp)[:G]
                   .reshape(N, n_t * th, Wo, Coutp)[:, :Ho, :, :Cout])
    return out.transpose(0, 3, 1, 2)   # back to NCHW (PyTorch convention)


def _reference(x, weight, gamma, beta, prelu=0.0, eps=1e-5, quant_dtype=None):
    """Pure-JAX reference matching the PyTorch forward (training-mode BN)."""
    if quant_dtype is not None:
        x = x.astype(quant_dtype).astype(jnp.float32)
        weight = weight.astype(quant_dtype).astype(jnp.float32)
    a = jnp.where(x > 0, x, x * prelu)
    if quant_dtype is not None:
        a = a.astype(quant_dtype).astype(jnp.float32)
    y = lax.conv_general_dilated(
        a, weight, window_strides=(2, 2), padding=((1, 1), (1, 1)),
        dimension_numbers=("NCHW", "OIHW", "NCHW"),
        precision=lax.Precision.HIGHEST)
    mean = y.mean(axis=(0, 2, 3), keepdims=True)
    var = y.var(axis=(0, 2, 3), keepdims=True)
    yhat = (y - mean) * lax.rsqrt(var + eps)
    return yhat * gamma.reshape(1, -1, 1, 1) + beta.reshape(1, -1, 1, 1)


if __name__ == "__main__":
    # blockUNet(in_ch=4, out_ch=8, transposed=False, bn=True, prelu=0.2, dropout=0)
    N, Cin, Cout, H, W = 2, 4, 8, 16, 16
    prelu = 0.2

    key = jax.random.PRNGKey(0)
    kx, kw = jax.random.split(key)
    x = jax.random.normal(kx, (N, Cin, H, W), dtype=jnp.float32)
    weight = 0.1 * jax.random.normal(kw, (Cout, Cin, 4, 4), dtype=jnp.float32)
    gamma = jnp.ones((Cout,), jnp.float32)   # PyTorch BatchNorm2d init
    beta = jnp.zeros((Cout,), jnp.float32)

    fwd = jax.jit(functools.partial(block_unet_forward, prelu=prelu, bn=True))
    out = jax.block_until_ready(fwd(x, weight, gamma, beta))
    assert out.shape == (N, Cout, H // 2, W // 2), out.shape

    # tight check vs. a reference with the same bf16 input/weight quantization
    ref_q = _reference(x, weight, gamma, beta, prelu=prelu,
                       quant_dtype=jnp.bfloat16)
    err_q = float(jnp.max(jnp.abs(out - ref_q)))
    assert err_q < 5e-3, err_q

    # loose sanity check vs. the full-f32 reference (output is unit-variance)
    ref_f = _reference(x, weight, gamma, beta, prelu=prelu)
    err_f = float(jnp.max(jnp.abs(out - ref_f)))
    assert err_f < 1e-1, err_f

    print("KERNEL_OK")
</pallas_src>

<mosaic_0001>
module attributes {stable_mosaic.version = 11 : i64} {
  func.func @_bn_apply_kernel(%arg0: i32, %arg1: memref<64x128xf32, #tpu.memory_space<vmem>>, %arg2: memref<1x128xf32, #tpu.memory_space<vmem>>, %arg3: memref<1x128xf32, #tpu.memory_space<vmem>>, %arg4: memref<64x128xf32, #tpu.memory_space<vmem>>) attributes {dimension_semantics = [#tpu.dimension_semantics<parallel>], iteration_bounds = array<i64: 2>, scalar_prefetch = 0 : i64, scratch_operands = 0 : i64, tpu.core_type = #tpu.core_type<tc>, window_params = [{transform_indices = @transform_0, window_bounds = array<i64: 64, 128>}, {pipeline_mode = #tpu.pipeline_mode<synchronous>, transform_indices = @transform_1, window_bounds = array<i64: 1, 128>}, {pipeline_mode = #tpu.pipeline_mode<synchronous>, transform_indices = @transform_2, window_bounds = array<i64: 1, 128>}, {transform_indices = @transform_3, window_bounds = array<i64: 64, 128>}]} {
    %c0 = arith.constant 0 : index
    %c0_0 = arith.constant 0 : index
    %0 = vector.load %arg1[%c0, %c0_0] : memref<64x128xf32, #tpu.memory_space<vmem>>, vector<64x128xf32>
    %c0_1 = arith.constant 0 : index
    %c0_2 = arith.constant 0 : index
    %1 = vector.load %arg2[%c0_1, %c0_2] : memref<1x128xf32, #tpu.memory_space<vmem>>, vector<1x128xf32>
    %2 = vector.broadcast %1 : vector<1x128xf32> to vector<64x128xf32>
    %3 = arith.mulf %0, %2 : vector<64x128xf32>
    %c0_3 = arith.constant 0 : index
    %c0_4 = arith.constant 0 : index
    %4 = vector.load %arg3[%c0_3, %c0_4] : memref<1x128xf32, #tpu.memory_space<vmem>>, vector<1x128xf32>
    %5 = vector.broadcast %4 : vector<1x128xf32> to vector<64x128xf32>
    %6 = arith.addf %3, %5 : vector<64x128xf32>
    %c0_5 = arith.constant 0 : index
    %c0_6 = arith.constant 0 : index
    %7 = vector.load %arg4[%c0_5, %c0_6] : memref<64x128xf32, #tpu.memory_space<vmem>>, vector<64x128xf32>
    tpu.vector_store %arg4[%c0_5, %c0_6], %6 {strides = array<i32>} : memref<64x128xf32, #tpu.memory_space<vmem>>, vector<64x128xf32>,
    return
  }
  func.func @transform_0(%arg0: i32) -> (i32, i32) {
    %c0_i32 = arith.constant 0 : i32
    %c0_i32_0 = arith.constant 0 : i32
    return %arg0, %c0_i32 : i32, i32
  }
  func.func @transform_1(%arg0: i32) -> (i32, i32) {
    %c0_i32 = arith.constant 0 : i32
    %c0_i32_0 = arith.constant 0 : i32
    %c0_i32_1 = arith.constant 0 : i32
    return %c0_i32, %c0_i32_0 : i32, i32
  }
  func.func @transform_2(%arg0: i32) -> (i32, i32) {
    %c0_i32 = arith.constant 0 : i32
    %c0_i32_0 = arith.constant 0 : i32
    %c0_i32_1 = arith.constant 0 : i32
    return %c0_i32, %c0_i32_0 : i32, i32
  }
  func.func @transform_3(%arg0: i32) -> (i32, i32) {
    %c0_i32 = arith.constant 0 : i32
    %c0_i32_0 = arith.constant 0 : i32
    return %arg0, %c0_i32 : i32, i32
  }
}

module attributes {stable_mosaic.version = 11 : i64} {
  func.func @_conv_bn_stats_kernel(%arg0: i32, %arg1: i32, %arg2: memref<1x9x9x16xbf16, #tpu.memory_space<vmem>>, %arg3: memref<4x16x128xbf16, #tpu.memory_space<vmem>>, %arg4: memref<64x128xf32, #tpu.memory_space<vmem>>, %arg5: memref<8x128xf32, #tpu.memory_space<vmem>>, %arg6: memref<8x128xf32, #tpu.memory_space<vmem>>) attributes {dimension_semantics = [#tpu.dimension_semantics<parallel>, #tpu.dimension_semantics<arbitrary>], iteration_bounds = array<i64: 2, 1>, scalar_prefetch = 0 : i64, scratch_operands = 0 : i64, tpu.core_type = #tpu.core_type<tc>, window_params = [{transform_indices = @transform_0, window_bounds = array<i64: 1, 9, 9, 16>}, {pipeline_mode = #tpu.pipeline_mode<synchronous>, transform_indices = @transform_1, window_bounds = array<i64: 4, 16, 128>}, {transform_indices = @transform_2, window_bounds = array<i64: 64, 128>}, {transform_indices = @transform_3, window_bounds = array<i64: 8, 128>}, {transform_indices = @transform_4, window_bounds = array<i64: 8, 128>}]} {
    %c0 = arith.constant 0 : index
    %c0_0 = arith.constant 0 : index
    %c0_1 = arith.constant 0 : index
    %c0_2 = arith.constant 0 : index
    %0 = vector.load %arg2[%c0, %c0_0, %c0_1, %c0_2] : memref<1x9x9x16xbf16, #tpu.memory_space<vmem>>, vector<1x9x9x16xbf16>
    %1 = vector.shape_cast %0 : vector<1x9x9x16xbf16> to vector<9x9x16xbf16>
    %2 = arith.extf %1 : vector<9x9x16xbf16> to vector<9x9x16xf32>
    %cst = arith.constant 0.000000e+00 : f32
    %3 = vector.broadcast %cst : f32 to vector<9x9x16xf32>
    %4 = arith.cmpf ogt, %2, %3 : vector<9x9x16xf32>
    %cst_3 = arith.constant 2.000000e-01 : f32
    %5 = vector.broadcast %cst_3 : f32 to vector<9x9x16xf32>
    %6 = arith.mulf %2, %5 : vector<9x9x16xf32>
    %7 = arith.select %4, %2, %6 : vector<9x9x16xi1>, vector<9x9x16xf32>
    %8 = arith.truncf %7 : vector<9x9x16xf32> to vector<9x9x16xbf16>
    %cst_4 = arith.constant 0.000000e+00 : f32
    %9 = vector.broadcast %cst_4 : f32 to vector<64x128xf32>
    %10 = vector.extract_strided_slice %8 {offsets = [0, 0, 0], sizes = [8, 8, 16], strides = [1, 1, 1]} : vector<9x9x16xbf16> to vector<8x8x16xbf16>
    %11 = vector.shape_cast %10 : vector<8x8x16xbf16> to vector<64x16xbf16>
    %c0_5 = arith.constant 0 : index
    %c0_6 = arith.constant 0 : index
    %c0_7 = arith.constant 0 : index
    %12 = vector.load %arg3[%c0_5, %c0_6, %c0_7] : memref<4x16x128xbf16, #tpu.memory_space<vmem>>, vector<1x16x128xbf16>
    %13 = vector.shape_cast %12 : vector<1x16x128xbf16> to vector<16x128xbf16>
    %cst_8 = arith.constant dense<0.000000e+00> : vector<64x128xf32>
    %14 = tpu.matmul %11, %13, %cst_8 {dimension_numbers = #tpu.dot_dimension_numbers<[1], [0], [0], [1], [0, 0, 1, 1], [], []>} : vector<64x16xbf16>, vector<16x128xbf16>, vector<64x128xf32> -> vector<64x128xf32>
    %15 = arith.addf %9, %14 : vector<64x128xf32>
    %16 = vector.extract_strided_slice %8 {offsets = [0, 1, 0], sizes = [8, 8, 16], strides = [1, 1, 1]} : vector<9x9x16xbf16> to vector<8x8x16xbf16>
    %17 = vector.shape_cast %16 : vector<8x8x16xbf16> to vector<64x16xbf16>
    %c1 = arith.constant 1 : index
    %c0_9 = arith.constant 0 : index
    %c0_10 = arith.constant 0 : index
    %18 = vector.load %arg3[%c1, %c0_9, %c0_10] : memref<4x16x128xbf16, #tpu.memory_space<vmem>>, vector<1x16x128xbf16>
    %19 = vector.shape_cast %18 : vector<1x16x128xbf16> to vector<16x128xbf16>
    %cst_11 = arith.constant dense<0.000000e+00> : vector<64x128xf32>
    %20 = tpu.matmul %17, %19, %cst_11 {dimension_numbers = #tpu.dot_dimension_numbers<[1], [0], [0], [1], [0, 0, 1, 1], [], []>} : vector<64x16xbf16>, vector<16x128xbf16>, vector<64x128xf32> -> vector<64x128xf32>
    %21 = arith.addf %15, %20 : vector<64x128xf32>
    %22 = vector.extract_strided_slice %8 {offsets = [1, 0, 0], sizes = [8, 8, 16], strides = [1, 1, 1]} : vector<9x9x16xbf16> to vector<8x8x16xbf16>
    %23 = vector.shape_cast %22 : vector<8x8x16xbf16> to vector<64x16xbf16>
    %c2 = arith.constant 2 : index
    %c0_12 = arith.constant 0 : index
    %c0_13 = arith.constant 0 : index
    %24 = vector.load %arg3[%c2, %c0_12, %c0_13] : memref<4x16x128xbf16, #tpu.memory_space<vmem>>, vector<1x16x128xbf16>
    %25 = vector.shape_cast %24 : vector<1x16x128xbf16> to vector<16x128xbf16>
    %cst_14 = arith.constant dense<0.000000e+00> : vector<64x128xf32>
    %26 = tpu.matmul %23, %25, %cst_14 {dimension_numbers = #tpu.dot_dimension_numbers<[1], [0], [0], [1], [0, 0, 1, 1], [], []>} : vector<64x16xbf16>, vector<16x128xbf16>, vector<64x128xf32> -> vector<64x128xf32>
    %27 = arith.addf %21, %26 : vector<64x128xf32>
    %28 = vector.extract_strided_slice %8 {offsets = [1, 1, 0], sizes = [8, 8, 16], strides = [1, 1, 1]} : vector<9x9x16xbf16> to vector<8x8x16xbf16>
    %29 = vector.shape_cast %28 : vector<8x8x16xbf16> to vector<64x16xbf16>
    %c3 = arith.constant 3 : index
    %c0_15 = arith.constant 0 : index
    %c0_16 = arith.constant 0 : index
    %30 = vector.load %arg3[%c3, %c0_15, %c0_16] : memref<4x16x128xbf16, #tpu.memory_space<vmem>>, vector<1x16x128xbf16>
    %31 = vector.shape_cast %30 : vector<1x16x128xbf16> to vector<16x128xbf16>
    %cst_17 = arith.constant dense<0.000000e+00> : vector<64x128xf32>
    %32 = tpu.matmul %29, %31, %cst_17 {dimension_numbers = #tpu.dot_dimension_numbers<[1], [0], [0], [1], [0, 0, 1, 1], [], []>} : vector<64x16xbf16>, vector<16x128xbf16>, vector<64x128xf32> -> vector<64x128xf32>
    %33 = arith.addf %27, %32 : vector<64x128xf32>
    %c0_18 = arith.constant 0 : index
    %c0_19 = arith.constant 0 : index
    %34 = vector.load %arg4[%c0_18, %c0_19] : memref<64x128xf32, #tpu.memory_space<vmem>>, vector<64x128xf32>
    tpu.vector_store %arg4[%c0_18, %c0_19], %33 {strides = array<i32>} : memref<64x128xf32, #tpu.memory_space<vmem>>, vector<64x128xf32>,
    %c0_i32 = arith.constant 0 : i32
    %35 = arith.cmpi eq, %arg1, %c0_i32 : i32
    %36 = arith.extui %35 : i1 to i32
    %c0_i32_20 = arith.constant 0 : i32
    %37 = arith.cmpi ne, %36, %c0_i32_20 : i32
    scf.if %37 {
      %cst_31 = arith.constant 0.000000e+00 : f32
      %49 = vector.broadcast %cst_31 : f32 to vector<8x128xf32>
      %c0_32 = arith.constant 0 : index
      %c0_33 = arith.constant 0 : index
      %50 = vector.load %arg5[%c0_32, %c0_33] : memref<8x128xf32, #tpu.memory_space<vmem>>, vector<8x128xf32>
      tpu.vector_store %arg5[%c0_32, %c0_33], %49 {strides = array<i32>} : memref<8x128xf32, #tpu.memory_space<vmem>>, vector<8x128xf32>,
      %cst_34 = arith.constant 0.000000e+00 : f32
      %51 = vector.broadcast %cst_34 : f32 to vector<8x128xf32>
      %c0_35 = arith.constant 0 : index
      %c0_36 = arith.constant 0 : index
      %52 = vector.load %arg6[%c0_35, %c0_36] : memref<8x128xf32, #tpu.memory_space<vmem>>, vector<8x128xf32>
      tpu.vector_store %arg6[%c0_35, %c0_36], %51 {strides = array<i32>} : memref<8x128xf32, #tpu.memory_space<vmem>>, vector<8x128xf32>,
    } else {
    }
    %c0_21 = arith.constant 0 : index
    %c0_22 = arith.constant 0 : index
    %38 = vector.load %arg5[%c0_21, %c0_22] : memref<8x128xf32, #tpu.memory_space<vmem>>, vector<8x128xf32>
    %39 = vector.shape_cast %33 : vector<64x128xf32> to vector<8x8x128xf32>
    %cst_23 = arith.constant dense<0.000000e+00> : vector<8x128xf32>
    %40 = vector.multi_reduction <add>, %39, %cst_23 [0] : vector<8x8x128xf32> to vector<8x128xf32>
    %41 = arith.addf %38, %40 : vector<8x128xf32>
    %c0_24 = arith.constant 0 : index
    %c0_25 = arith.constant 0 : index
    %42 = vector.load %arg5[%c0_24, %c0_25] : memref<8x128xf32, #tpu.memory_space<vmem>>, vector<8x128xf32>
    tpu.vector_store %arg5[%c0_24, %c0_25], %41 {strides = array<i32>} : memref<8x128xf32, #tpu.memory_space<vmem>>, vector<8x128xf32>,
    %c0_26 = arith.constant 0 : index
    %c0_27 = arith.constant 0 : index
    %43 = vector.load %arg6[%c0_26, %c0_27] : memref<8x128xf32, #tpu.memory_space<vmem>>, vector<8x128xf32>
    %44 = arith.mulf %33, %33 : vector<64x128xf32>
    %45 = vector.shape_cast %44 : vector<64x128xf32> to vector<8x8x128xf32>
    %cst_28 = arith.constant dense<0.000000e+00> : vector<8x128xf32>
    %46 = vector.multi_reduction <add>, %45, %cst_28 [0] : vector<8x8x128xf32> to vector<8x128xf32>
    %47 = arith.addf %43, %46 : vector<8x128xf32>
    %c0_29 = arith.constant 0 : index
    %c0_30 = arith.constant 0 : index
    %48 = vector.load %arg6[%c0_29, %c0_30] : memref<8x128xf32, #tpu.memory_space<vmem>>, vector<8x128xf32>
    tpu.vector_store %arg6[%c0_29, %c0_30], %47 {strides = array<i32>} : memref<8x128xf32, #tpu.memory_space<vmem>>, vector<8x128xf32>,
    return
  }
  func.func @transform_0(%arg0: i32, %arg1: i32) -> (i32, i32, i32, i32) {
    %c1_i32 = arith.constant 1 : i32
    %0 = arith.muli %arg0, %c1_i32 : i32
    %1 = arith.addi %0, %arg1 : i32
    %c0_i32 = arith.constant 0 : i32
    %c0_i32_0 = arith.constant 0 : i32
    %c0_i32_1 = arith.constant 0 : i32
    %c0_i32_2 = arith.constant 0 : i32
    return %1, %c0_i32, %c0_i32_0, %c0_i32_1 : i32, i32, i32, i32
  }
  func.func @transform_1(%arg0: i32, %arg1: i32) -> (i32, i32, i32) {
    %c0_i32 = arith.constant 0 : i32
    %c0_i32_0 = arith.constant 0 : i32
    %c0_i32_1 = arith.constant 0 : i32
    %c0_i32_2 = arith.constant 0 : i32
    return %c0_i32, %c0_i32_0, %c0_i32_1 : i32, i32, i32
  }
  func.func @transform_2(%arg0: i32, %arg1: i32) -> (i32, i32) {
    %c1_i32 = arith.constant 1 : i32
    %0 = arith.muli %arg0, %c1_i32 : i32
    %1 = arith.addi %0, %arg1 : i32
    %c0_i32 = arith.constant 0 : i32
    %c0_i32_0 = arith.constant 0 : i32
    return %1, %c0_i32 : i32, i32
  }
  func.func @transform_3(%arg0: i32, %arg1: i32) -> (i32, i32) {
    %c0_i32 = arith.constant 0 : i32
    %c0_i32_0 = arith.constant 0 : i32
    return %arg0, %c0_i32 : i32, i32
  }
  func.func @transform_4(%arg0: i32, %arg1: i32) -> (i32, i32) {
    %c0_i32 = arith.constant 0 : i32
    %c0_i32_0 = arith.constant 0 : i32
    return %arg0, %c0_i32 : i32, i32
  }
}

</mosaic_0001>

<llo_original>
// kernel: block_unet_forward.3
$region0: #{block_unet_forward.3}
  #allocation0 [shape = 'u32[]', space=smem, size = 0x4, offset = 0x4, fixed_abs, tag = 'smem constant byte address 0x4 - core index']
  #allocation1 [shape = 'u32[144,128]{1,0:T(1,128)}', space=vmem, size = 0x12000, scoped, tag = 'internal scratch']
  %s0 = inlined_call_operand.vmem [shape: f32[128,128], index: 0, kind: input, shape index: {}, may-alias: {0,3}]
  %s1 = inlined_call_operand.vmem [shape: f32[1,128], index: 1, kind: input, shape index: {}]
  %s2 = inlined_call_operand.vmem [shape: f32[1,128], index: 2, kind: input, shape index: {}]
  %s3 = inlined_call_operand.vmem [shape: f32[128,128], index: 3, kind: output, shape index: {}, may-alias: {0,3}]
  %s4 = sld [smem:[#allocation0]]
  $region45: #{block_unet_forward.3} parent=0
    _
  %s6 = ssub.s32 1, %s4
  %s7 = scalar_select 0, %s6, %s4
  loop: start=0, step=1, limit=4
  $region2: #{block_unet_forward.3} parent=0 // loop_pre_header
    _
  $region3: #{block_unet_forward.3} parent=0 // loop_header
    %s9 = sphi 0, %s13
    %p10 = scmp.ge.s32.totalorder %s9, 4
    %s19 = sphi 0, %s21
    %s22 = sphi 0, %s19
    %s23 = sphi 0, %s22
    %s39 = sphi 0, %s23
    %s43 = sphi 0, %s43
    %s45 = sphi 0, %s43
    %s46 = sphi 0, %s45
    %s60 = sphi 0, %s46
    %s64 = sphi 0, %s64
    %s66 = sphi 0, %s64
    %s67 = sphi 0, %s66
    %s81 = sphi 0, %s67
    %s87 = sphi 0, %s89
    %s90 = sphi 0, %s87
    %s91 = sphi 0, %s90
    %s107 = sphi 0, %s91
  $region4: #{block_unet_forward.3} parent=0 // loop_header_branch
    %12 = sbr.rel (%p10) target = $region8
  $region5: #{block_unet_forward.3} parent=0 // loop_body
    %s14 = ssub.s32 %s9, 1
    %s15 = ssub.s32 %s9, 2
    %s16 = sadd.s32 %s9, 1
    %s17 = ssub.s32 %s9, %s16
    %p18 = scmp.eq.s32.totalorder %s17, 0
    %s20 = sadd.s32 %s19, 1
    %s21 = scalar_select %p18, %s19, %s20
    %p24 = pneg %p18
    %p25 = scmp.eq.s32.totalorder %s9, 1
    %p26 = por %p24, %p25
    %p27 = scmp.ne.s32.totalorder %s19, %s22
    %p28 = scmp.eq.s32.totalorder %s9, 0
    %p29 = por %p27, %p28
    %p30 = scmp.ne.s32.totalorder %s19, %s22
    %p31 = scmp.eq.s32.totalorder %s14, 1
    %p32 = por %p30, %p31
    %p33 = scmp.ne.s32.totalorder %s22, %s23
    %p34 = scmp.eq.s32.totalorder %s14, 0
    %p35 = por %p33, %p34
    %p36 = scmp.ne.s32.totalorder %s22, %s23
    %p37 = scmp.eq.s32.totalorder %s15, 1
    %p38 = por %p36, %p37
    %p40 = scmp.ne.s32.totalorder %s23, %s39
    %p41 = scmp.eq.s32.totalorder %s15, 0
    %p42 = por %p40, %p41
    %s44 = sadd.s32 %s43, 1
    %p47 = scmp.eq.s32.totalorder %s9, 1
    %p48 = scmp.ne.s32.totalorder %s43, %s45
    %p49 = scmp.eq.s32.totalorder %s9, 0
    %p50 = por %p48, %p49
    %p51 = scmp.ne.s32.totalorder %s43, %s45
    %p52 = scmp.eq.s32.totalorder %s14, 1
    %p53 = por %p51, %p52
    %p54 = scmp.ne.s32.totalorder %s45, %s46
    %p55 = scmp.eq.s32.totalorder %s14, 0
    %p56 = por %p54, %p55
    %p57 = scmp.ne.s32.totalorder %s45, %s46
    %p58 = scmp.eq.s32.totalorder %s15, 1
    %p59 = por %p57, %p58
    %p61 = scmp.ne.s32.totalorder %s46, %s60
    %p62 = scmp.eq.s32.totalorder %s15, 0
    %p63 = por %p61, %p62
    %s65 = sadd.s32 %s64, 1
    %p68 = scmp.eq.s32.totalorder %s9, 1
    %p69 = scmp.ne.s32.totalorder %s64, %s66
    %p70 = scmp.eq.s32.totalorder %s9, 0
    %p71 = por %p69, %p70
    %p72 = scmp.ne.s32.totalorder %s64, %s66
    %p73 = scmp.eq.s32.totalorder %s14, 1
    %p74 = por %p72, %p73
    %p75 = scmp.ne.s32.totalorder %s66, %s67
    %p76 = scmp.eq.s32.totalorder %s14, 0
    %p77 = por %p75, %p76
    %p78 = scmp.ne.s32.totalorder %s66, %s67
    %p79 = scmp.eq.s32.totalorder %s15, 1
    %p80 = por %p78, %p79
    %p82 = scmp.ne.s32.totalorder %s67, %s81
    %p83 = scmp.eq.s32.totalorder %s15, 0
    %p84 = por %p82, %p83
    %s85 = ssub.s32 %s9, %s16
    %p86 = scmp.eq.s32.totalorder %s85, 0
    %s88 = sadd.s32 %s87, 1
    %s89 = scalar_select %p86, %s87, %s88
    %p92 = pneg %p86
    %p93 = scmp.eq.s32.totalorder %s9, 1
    %p94 = por %p92, %p93
    %p95 = scmp.ne.s32.totalorder %s87, %s90
    %p96 = scmp.eq.s32.totalorder %s9, 0
    %p97 = por %p95, %p96
    %p98 = scmp.ne.s32.totalorder %s87, %s90
    %p99 = scmp.eq.s32.totalorder %s14, 1
    %p100 = por %p98, %p99
    %p101 = scmp.ne.s32.totalorder %s90, %s91
    %p102 = scmp.eq.s32.totalorder %s14, 0
    %p103 = por %p101, %p102
    %p104 = scmp.ne.s32.totalorder %s90, %s91
    %p105 = scmp.eq.s32.totalorder %s15, 1
    %p106 = por %p104, %p105
    %p108 = scmp.ne.s32.totalorder %s91, %s107
    %p109 = scmp.eq.s32.totalorder %s15, 0
    %p110 = por %p108, %p109
    %p111 = scmp.le.s32.totalorder 1, %s9
    %p112 = scmp.lt.s32.totalorder %s9, 3
    %p113 = pnand %p111, %p112
    %p114 = pneg %p113
    // Predicated region
    $region9: #{block_unet_forward.3} parent=5 // pred_check
      _
    $region10: #{block_unet_forward.3} parent=5 // pred_check_branch
      %116 = sbr.rel (%p113) target = $region12
    $region11: #{block_unet_forward.3} parent=5 // pred_region
      %s117 = ssub.s32 %s9, 1
      // Predicated region
      $region13: #{block_unet_forward.3} parent=11 // pred_check
        %p118 = pneg %p56
      $region14: #{block_unet_forward.3} parent=11 // pred_check_branch
        %120 = sbr.rel (%p118) target = $region16
      $region15: #{block_unet_forward.3} parent=11 // pred_region
        _
      $region16: #{block_unet_forward.3} parent=11 // pred_fallthru
        _
      // Predicated region
      $region17: #{block_unet_forward.3} parent=11 // pred_check
        %p121 = pneg %p77
      $region18: #{block_unet_forward.3} parent=11 // pred_check_branch
        %123 = sbr.rel (%p121) target = $region20
      $region19: #{block_unet_forward.3} parent=11 // pred_region
        _
      $region20: #{block_unet_forward.3} parent=11 // pred_fallthru
        _
    $region12: #{block_unet_forward.3} parent=5 // pred_fallthru
      _
    %p124 = scmp.lt.s32.totalorder %s9, 2
    // Predicated region
    $region21: #{block_unet_forward.3} parent=5 // pred_check
      %p125 = pneg %p124
    $region22: #{block_unet_forward.3} parent=5 // pred_check_branch
      %127 = sbr.rel (%p125) target = $region24
    $region23: #{block_unet_forward.3} parent=5 // pred_region
      // Predicated region
      $region25: #{block_unet_forward.3} parent=23 // pred_check
        %p128 = pneg %p29
      $region26: #{block_unet_forward.3} parent=23 // pred_check_branch
        %130 = sbr.rel (%p128) target = $region28
      $region27: #{block_unet_forward.3} parent=23 // pred_region
        %s131 = smul.u32 8, %s9
        %p132 = scmp.lt.s32.totalorder %s131, 15
        %s133 = scalar_select %p132, %s131, 15
        %s134 = smul.addr %s133, 8
        %s135 = scalar_lea.vmem %s0, %s134
        %s136 = smul.u32 8, %s9
      $region28: #{block_unet_forward.3} parent=23 // pred_fallthru
        _
    $region24: #{block_unet_forward.3} parent=5 // pred_fallthru
      _
    %p137 = scmp.le.s32.totalorder 1, %s9
    %p138 = scmp.lt.s32.totalorder %s9, 3
    %p139 = pnand %p137, %p138
    %p140 = pneg %p139
    // Predicated region
    $region29: #{block_unet_forward.3} parent=5 // pred_check
      _
    $region30: #{block_unet_forward.3} parent=5 // pred_check_branch
      %142 = sbr.rel (%p139) target = $region32
    $region31: #{block_unet_forward.3} parent=5 // pred_region
      %s143 = ssub.s32 %s9, 1
      %s144 = smul.u32 8, %s14
      %p145 = scmp.lt.s32.totalorder %s144, 15
      %s146 = scalar_select %p145, %s144, 15
      %s147 = smul.addr %s146, 8
      %s148 = scalar_lea.vmem %s0, %s147
      %p149 = pneg %p35
      %p150 = pneg %p32
      %p151 = pneg %p56
      %p152 = pneg %p53
      %p153 = pneg %p77
      %p154 = pneg %p74
      %p155 = pneg %p103
      %p156 = pneg %p100
      %s157 = smul.u32 8, %s14
      %p158 = scmp.lt.s32.totalorder %s157, 15
      %s159 = scalar_select %p158, %s157, 15
      %s160 = smul.addr %s159, 8
      %s161 = scalar_lea.vmem %s3, %s160
      %s162 = smul.u32 8, %s14
      %p163 = scmp.lt.s32.totalorder %s162, 15
      %s164 = scalar_select %p163, %s162, 15
      %s165 = smul.addr %s164, 8
      %s166 = scalar_lea.vmem %s0, %s165
      %s167 = smul.u32 8, %s14
      %s168 = smul.u32 8, %s14
      %p169 = scmp.lt.s32.totalorder %s168, 15
      %s170 = scalar_select %p169, %s168, 15
      %s171 = smul.addr %s170, 8
      %s172 = scalar_lea.vmem %s3, %s171
      %s173 = smul.u32 8, %s14
      %v174 = vld [vmem:[%s166] sm:$0xff]
      %v175 = vld [vmem:[%s166 + $0x8] sm:$0xff]
      %v176 = vld [vmem:[%s166 + $0x10] sm:$0xff]
      %v177 = vld [vmem:[%s166 + $0x18] sm:$0xff]
      %v178 = vld [vmem:[%s166 + $0x20] sm:$0xff]
      %v179 = vld [vmem:[%s166 + $0x28] sm:$0xff]
      %v180 = vld [vmem:[%s166 + $0x30] sm:$0xff]
      %v181 = vld [vmem:[%s166 + $0x38] sm:$0xff]
      %v182 = vld [vmem:[%s1] sm:$0x1]
      %v184 = vlaneseq
      %v185 = vshrl.u32 %v184, 7
      %v186 = vsub.s32 0, %v185
      %v187 = vrot.slane %v182, %v186
      %v189 = vmul.f32 %v174, %v187
      %v190 = vmul.f32 %v175, %v187
      %v191 = vmul.f32 %v176, %v187
      %v192 = vmul.f32 %v177, %v187
      %v193 = vmul.f32 %v178, %v187
      %v194 = vmul.f32 %v179, %v187
      %v195 = vmul.f32 %v180, %v187
      %v196 = vmul.f32 %v181, %v187
      %v197 = vld [vmem:[%s2] sm:$0x1]
      %v199 = vlaneseq
      %v200 = vshrl.u32 %v199, 7
      %v201 = vsub.s32 0, %v200
      %v202 = vrot.slane %v197, %v201
      %v204 = vadd.f32 %v189, %v202
      %v205 = vadd.f32 %v190, %v202
      %v206 = vadd.f32 %v191, %v202
      %v207 = vadd.f32 %v192, %v202
      %v208 = vadd.f32 %v193, %v202
      %v209 = vadd.f32 %v194, %v202
      %v210 = vadd.f32 %v195, %v202
      %v211 = vadd.f32 %v196, %v202
      %212 = vst [vmem:[%s172] sm:$0xff] %v204
      %213 = vst [vmem:[%s172 + $0x8] sm:$0xff] %v205
      %214 = vst [vmem:[%s172 + $0x10] sm:$0xff] %v206
      %215 = vst [vmem:[%s172 + $0x18] sm:$0xff] %v207
      %216 = vst [vmem:[%s172 + $0x20] sm:$0xff] %v208
      %217 = vst [vmem:[%s172 + $0x28] sm:$0xff] %v209
      %218 = vst [vmem:[%s172 + $0x30] sm:$0xff] %v210
      %219 = vst [vmem:[%s172 + $0x38] sm:$0xff] %v211
      %s220 = smul.u32 8, %s14
      %p221 = scmp.lt.s32.totalorder %s220, 15
      %s222 = scalar_select %p221, %s220, 15
      %s223 = smul.addr %s222, 8
      %s224 = scalar_lea.vmem %s3, %s223
      // Predicated region
      $region33: #{block_unet_forward.3} parent=31 // pred_check
        %p225 = pneg %p100
      $region34: #{block_unet_forward.3} parent=31 // pred_check_branch
        %227 = sbr.rel (%p225) target = $region36
      $region35: #{block_unet_forward.3} parent=31 // pred_region
        %s228 = smul.u32 8, %s14
      $region36: #{block_unet_forward.3} parent=31 // pred_fallthru
        _
    $region32: #{block_unet_forward.3} parent=5 // pred_fallthru
      _
    %p229 = scmp.le.s32.totalorder 2, %s9
    // Predicated region
    $region37: #{block_unet_forward.3} parent=5 // pred_check
      %p230 = pneg %p229
    $region38: #{block_unet_forward.3} parent=5 // pred_check_branch
      %232 = sbr.rel (%p230) target = $region40
    $region39: #{block_unet_forward.3} parent=5 // pred_region
      %s233 = ssub.s32 %s9, 2
      // Predicated region
      $region41: #{block_unet_forward.3} parent=39 // pred_check
        %p234 = pneg %p106
      $region42: #{block_unet_forward.3} parent=39 // pred_check_branch
        %236 = sbr.rel (%p234) target = $region44
      $region43: #{block_unet_forward.3} parent=39 // pred_region
        %s237 = smul.u32 8, %s15
        %p238 = scmp.lt.s32.totalorder %s237, 15
        %s239 = scalar_select %p238, %s237, 15
        %s240 = smul.addr %s239, 8
        %s241 = scalar_lea.vmem %s3, %s240
      $region44: #{block_unet_forward.3} parent=39 // pred_fallthru
        _
    $region40: #{block_unet_forward.3} parent=5 // pred_fallthru
      _
  $region6: #{block_unet_forward.3} parent=0 // loop_footer
    %s13 = sadd.s32 1, %s9
  $region7: #{block_unet_forward.3} parent=0 // loop_footer_branch
    %8 = sbr.rel target = $region3
  $region8: #{block_unet_forward.3} parent=0 // loop_exit
    _

// kernel: block_unet_forward.2
$region0: #{block_unet_forward.2}
  #allocation0 [shape = 'u32[]', space=smem, size = 0x4, offset = 0x4, fixed_abs, tag = 'smem constant byte address 0x4 - core index']
  #allocation1 [shape = 'u32[144,128]{1,0:T(1,128)}', space=vmem, size = 0x12000, scoped, tag = 'internal scratch']
  %s0 = inlined_call_operand.vmem [shape: bf16[2,9,9,16], index: 0, kind: input, shape index: {}]
  %s1 = inlined_call_operand.vmem [shape: bf16[4,16,128], index: 1, kind: input, shape index: {}]
  %s2 = inlined_call_operand.vmem [shape: f32[128,128], index: 2, kind: output, shape index: {0}]
  %s3 = inlined_call_operand.vmem [shape: f32[16,128], index: 3, kind: output, shape index: {1}]
  %s4 = inlined_call_operand.vmem [shape: f32[16,128], index: 4, kind: output, shape index: {2}]
  %5 = xla_tuple %s2, %s3, %s4
  %s6 = sld [smem:[#allocation0]]
  $region61: #{block_unet_forward.2} parent=0
    _
  %s8 = ssub.s32 1, %s6
  %s9 = scalar_select 0, %s8, %s6
  loop: start=0, step=1, limit=4
  $region2: #{block_unet_forward.2} parent=0 // loop_pre_header
    _
  $region3: #{block_unet_forward.2} parent=0 // loop_header
    %s11 = sphi 0, %s15
    %p12 = scmp.ge.s32.totalorder %s11, 4
    %s18 = sphi 0, %s30
    %s19 = sphi 0, %s26
    %s20 = sphi 0, %s18
    %s21 = sphi 0, %s19
    %s22 = sphi 0, %s20
    %s23 = sphi 0, %s21
    %s35 = sphi 0, %s37
    %s38 = sphi 0, %s35
    %s39 = sphi 0, %s38
    %s55 = sphi 0, %s39
    %s59 = sphi 0, %s59
    %s61 = sphi 0, %s59
    %s62 = sphi 0, %s61
    %s76 = sphi 0, %s62
    %s84 = sphi 0, %s86
    %s87 = sphi 0, %s84
    %s88 = sphi 0, %s87
    %s104 = sphi 0, %s88
    %s110 = sphi 0, %s112
    %s113 = sphi 0, %s110
    %s114 = sphi 0, %s113
    %s130 = sphi 0, %s114
    %s136 = sphi 0, %s138
    %s139 = sphi 0, %s136
    %s140 = sphi 0, %s139
    %s156 = sphi 0, %s140
  $region4: #{block_unet_forward.2} parent=0 // loop_header_branch
    %14 = sbr.rel (%p12) target = $region8
  $region5: #{block_unet_forward.2} parent=0 // loop_body
    %s16 = ssub.s32 %s11, 1
    %s17 = ssub.s32 %s11, 2
    %s24 = sadd.s32 1, %s19
    %p25 = scmp.ge.s32.totalorder %s24, 1
    %s26 = scalar_select %p25, 0, %s24
    %s27 = sadd.s32 1, %s18
    %s28 = scalar_select %p25, %s27, %s18
    %p29 = scmp.ge.s32.totalorder %s28, 2
    %s30 = scalar_select %p29, 0, %s28
    %s31 = sadd.s32 %s18, %s19
    %s32 = sadd.s32 %s30, %s26
    %s33 = ssub.s32 %s31, %s32
    %p34 = scmp.eq.s32.totalorder %s33, 0
    %s36 = sadd.s32 %s35, 1
    %s37 = scalar_select %p34, %s35, %s36
    %p40 = pneg %p34
    %p41 = scmp.eq.s32.totalorder %s11, 1
    %p42 = por %p40, %p41
    %p43 = scmp.ne.s32.totalorder %s35, %s38
    %p44 = scmp.eq.s32.totalorder %s11, 0
    %p45 = por %p43, %p44
    %p46 = scmp.ne.s32.totalorder %s35, %s38
    %p47 = scmp.eq.s32.totalorder %s16, 1
    %p48 = por %p46, %p47
    %p49 = scmp.ne.s32.totalorder %s38, %s39
    %p50 = scmp.eq.s32.totalorder %s16, 0
    %p51 = por %p49, %p50
    %p52 = scmp.ne.s32.totalorder %s38, %s39
    %p53 = scmp.eq.s32.totalorder %s17, 1
    %p54 = por %p52, %p53
    %p56 = scmp.ne.s32.totalorder %s39, %s55
    %p57 = scmp.eq.s32.totalorder %s17, 0
    %p58 = por %p56, %p57
    %s60 = sadd.s32 %s59, 1
    %p63 = scmp.eq.s32.totalorder %s11, 1
    %p64 = scmp.ne.s32.totalorder %s59, %s61
    %p65 = scmp.eq.s32.totalorder %s11, 0
    %p66 = por %p64, %p65
    %p67 = scmp.ne.s32.totalorder %s59, %s61
    %p68 = scmp.eq.s32.totalorder %s16, 1
    %p69 = por %p67, %p68
    %p70 = scmp.ne.s32.totalorder %s61, %s62
    %p71 = scmp.eq.s32.totalorder %s16, 0
    %p72 = por %p70, %p71
    %p73 = scmp.ne.s32.totalorder %s61, %s62
    %p74 = scmp.eq.s32.totalorder %s17, 1
    %p75 = por %p73, %p74
    %p77 = scmp.ne.s32.totalorder %s62, %s76
    %p78 = scmp.eq.s32.totalorder %s17, 0
    %p79 = por %p77, %p78
    %s80 = sadd.s32 %s18, %s19
    %s81 = sadd.s32 %s30, %s26
    %s82 = ssub.s32 %s80, %s81
    %p83 = scmp.eq.s32.totalorder %s82, 0
    %s85 = sadd.s32 %s84, 1
    %s86 = scalar_select %p83, %s84, %s85
    %p89 = pneg %p83
    %p90 = scmp.eq.s32.totalorder %s11, 1
    %p91 = por %p89, %p90
    %p92 = scmp.ne.s32.totalorder %s84, %s87
    %p93 = scmp.eq.s32.totalorder %s11, 0
    %p94 = por %p92, %p93
    %p95 = scmp.ne.s32.totalorder %s84, %s87
    %p96 = scmp.eq.s32.totalorder %s16, 1
    %p97 = por %p95, %p96
    %p98 = scmp.ne.s32.totalorder %s87, %s88
    %p99 = scmp.eq.s32.totalorder %s16, 0
    %p100 = por %p98, %p99
    %p101 = scmp.ne.s32.totalorder %s87, %s88
    %p102 = scmp.eq.s32.totalorder %s17, 1
    %p103 = por %p101, %p102
    %p105 = scmp.ne.s32.totalorder %s88, %s104
    %p106 = scmp.eq.s32.totalorder %s17, 0
    %p107 = por %p105, %p106
    %s108 = ssub.s32 %s18, %s30
    %p109 = scmp.eq.s32.totalorder %s108, 0
    %s111 = sadd.s32 %s110, 1
    %s112 = scalar_select %p109, %s110, %s111
    %p115 = pneg %p109
    %p116 = scmp.eq.s32.totalorder %s11, 1
    %p117 = por %p115, %p116
    %p118 = scmp.ne.s32.totalorder %s110, %s113
    %p119 = scmp.eq.s32.totalorder %s11, 0
    %p120 = por %p118, %p119
    %p121 = scmp.ne.s32.totalorder %s110, %s113
    %p122 = scmp.eq.s32.totalorder %s16, 1
    %p123 = por %p121, %p122
    %p124 = scmp.ne.s32.totalorder %s113, %s114
    %p125 = scmp.eq.s32.totalorder %s16, 0
    %p126 = por %p124, %p125
    %p127 = scmp.ne.s32.totalorder %s113, %s114
    %p128 = scmp.eq.s32.totalorder %s17, 1
    %p129 = por %p127, %p128
    %p131 = scmp.ne.s32.totalorder %s114, %s130
    %p132 = scmp.eq.s32.totalorder %s17, 0
    %p133 = por %p131, %p132
    %s134 = ssub.s32 %s18, %s30
    %p135 = scmp.eq.s32.totalorder %s134, 0
    %s137 = sadd.s32 %s136, 1
    %s138 = scalar_select %p135, %s136, %s137
    %p141 = pneg %p135
    %p142 = scmp.eq.s32.totalorder %s11, 1
    %p143 = por %p141, %p142
    %p144 = scmp.ne.s32.totalorder %s136, %s139
    %p145 = scmp.eq.s32.totalorder %s11, 0
    %p146 = por %p144, %p145
    %p147 = scmp.ne.s32.totalorder %s136, %s139
    %p148 = scmp.eq.s32.totalorder %s16, 1
    %p149 = por %p147, %p148
    %p150 = scmp.ne.s32.totalorder %s139, %s140
    %p151 = scmp.eq.s32.totalorder %s16, 0
    %p152 = por %p150, %p151
    %p153 = scmp.ne.s32.totalorder %s139, %s140
    %p154 = scmp.eq.s32.totalorder %s17, 1
    %p155 = por %p153, %p154
    %p157 = scmp.ne.s32.totalorder %s140, %s156
    %p158 = scmp.eq.s32.totalorder %s17, 0
    %p159 = por %p157, %p158
    %p160 = scmp.le.s32.totalorder 1, %s11
    %p161 = scmp.lt.s32.totalorder %s11, 3
    %p162 = pnand %p160, %p161
    %p163 = pneg %p162
    // Predicated region
    $region9: #{block_unet_forward.2} parent=5 // pred_check
      _
    $region10: #{block_unet_forward.2} parent=5 // pred_check_branch
      %165 = sbr.rel (%p162) target = $region12
    $region11: #{block_unet_forward.2} parent=5 // pred_region
      %s166 = ssub.s32 %s11, 1
      // Predicated region
      $region13: #{block_unet_forward.2} parent=11 // pred_check
        %p167 = pneg %p72
      $region14: #{block_unet_forward.2} parent=11 // pred_check_branch
        %169 = sbr.rel (%p167) target = $region16
      $region15: #{block_unet_forward.2} parent=11 // pred_region
        _
      $region16: #{block_unet_forward.2} parent=11 // pred_fallthru
        _
    $region12: #{block_unet_forward.2} parent=5 // pred_fallthru
      _
    %p170 = scmp.lt.s32.totalorder %s11, 2
    // Predicated region
    $region17: #{block_unet_forward.2} parent=5 // pred_check
      %p171 = pneg %p170
    $region18: #{block_unet_forward.2} parent=5 // pred_check_branch
      %173 = sbr.rel (%p171) target = $region20
    $region19: #{block_unet_forward.2} parent=5 // pred_region
      // Predicated region
      $region21: #{block_unet_forward.2} parent=19 // pred_check
        %p174 = pneg %p45
      $region22: #{block_unet_forward.2} parent=19 // pred_check_branch
        %176 = sbr.rel (%p174) target = $region24
      $region23: #{block_unet_forward.2} parent=19 // pred_region
        %s177 = sadd.s32 %s18, %s19
        %p178 = scmp.lt.s32.totalorder %s177, 1
        %s179 = scalar_select %p178, %s177, 1
        %s180 = smul.addr %s179, 18
        %s181 = smul.addr %s180, 4
        %s182 = scalar_lea.vmem %s0, %s181
        %s183 = sadd.s32 %s18, %s19
      $region24: #{block_unet_forward.2} parent=19 // pred_fallthru
        _
    $region20: #{block_unet_forward.2} parent=5 // pred_fallthru
      _
    %p184 = scmp.le.s32.totalorder 1, %s11
    %p185 = scmp.lt.s32.totalorder %s11, 3
    %p186 = pnand %p184, %p185
    %p187 = pneg %p186
    // Predicated region
    $region25: #{block_unet_forward.2} parent=5 // pred_check
      _
    $region26: #{block_unet_forward.2} parent=5 // pred_check_branch
      %189 = sbr.rel (%p186) target = $region28
    $region27: #{block_unet_forward.2} parent=5 // pred_region
      %s190 = ssub.s32 %s11, 1
      %s191 = sadd.s32 %s20, %s21
      %p192 = scmp.lt.s32.totalorder %s191, 1
      %s193 = scalar_select %p192, %s191, 1
      %s194 = smul.addr %s193, 18
      %s195 = smul.addr %s194, 4
      %s196 = scalar_lea.vmem %s0, %s195
      %p197 = pneg %p51
      %p198 = pneg %p48
      %p199 = pneg %p72
      %p200 = pneg %p69
      %p201 = pneg %p100
      %p202 = pneg %p97
      %s203 = sadd.s32 %s20, %s21
      %s204 = smul.u32 8, %s203
      %p205 = scmp.lt.s32.totalorder %s204, 15
      %s206 = scalar_select %p205, %s204, 15
      %s207 = smul.addr %s206, 8
      %s208 = scalar_lea.vmem %s2, %s207
      %p209 = pneg %p126
      %p210 = pneg %p123
      %p211 = scmp.lt.s32.totalorder %s20, 1
      %s212 = scalar_select %p211, %s20, 1
      %s213 = smul.addr %s212, 8
      %s214 = scalar_lea.vmem %s3, %s213
      %p215 = pneg %p152
      %p216 = pneg %p149
      %p217 = scmp.lt.s32.totalorder %s20, 1
      %s218 = scalar_select %p217, %s20, 1
      %s219 = smul.addr %s218, 8
      %s220 = scalar_lea.vmem %s4, %s219
      %s221 = sadd.s32 %s20, %s21
      %p222 = scmp.lt.s32.totalorder %s221, 1
      %s223 = scalar_select %p222, %s221, 1
      %s224 = smul.addr %s223, 18
      %s225 = smul.addr %s224, 4
      %s226 = scalar_lea.vmem %s0, %s225
      %s227 = sadd.s32 %s20, %s21
      %s228 = sadd.s32 %s20, %s21
      %s229 = smul.u32 8, %s228
      %p230 = scmp.lt.s32.totalorder %s229, 15
      %s231 = scalar_select %p230, %s229, 15
      %s232 = smul.addr %s231, 8
      %s233 = scalar_lea.vmem %s2, %s232
      %s234 = sadd.s32 %s20, %s21
      %s235 = smul.u32 8, %s234
      %p236 = scmp.lt.s32.totalorder %s20, 1
      %s237 = scalar_select %p236, %s20, 1
      %s238 = smul.addr %s237, 8
      %s239 = scalar_lea.vmem %s3, %s238
      %p240 = scmp.lt.s32.totalorder %s20, 1
      %s241 = scalar_select %p240, %s20, 1
      %s242 = smul.addr %s241, 8
      %s243 = scalar_lea.vmem %s4, %s242
      %v245 = vld [vmem:[%s226] sm:$0xf]
      %v246 = vld [vmem:[%s226 + $0x4] sm:$0x1]
      %v247 = vld [vmem:[%s226 + $0x8] sm:$0xf]
      %v248 = vld [vmem:[%s226 + $0xc] sm:$0x1]
      %v249 = vld [vmem:[%s226 + $0x10] sm:$0xf]
      %v250 = vld [vmem:[%s226 + $0x14] sm:$0x1]
      %v251 = vld [vmem:[%s226 + $0x18] sm:$0xf]
      %v252 = vld [vmem:[%s226 + $0x1c] sm:$0x1]
      %v253 = vld [vmem:[%s226 + $0x20] sm:$0xf]
      %v254 = vld [vmem:[%s226 + $0x24] sm:$0x1]
      %v255 = vld [vmem:[%s226 + $0x28] sm:$0xf]
      %v256 = vld [vmem:[%s226 + $0x2c] sm:$0x1]
      %v257 = vld [vmem:[%s226 + $0x30] sm:$0xf]
      %v258 = vld [vmem:[%s226 + $0x34] sm:$0x1]
      %v259 = vld [vmem:[%s226 + $0x38] sm:$0xf]
      %v260 = vld [vmem:[%s226 + $0x3c] sm:$0x1]
      %v261 = vld [vmem:[%s226 + $0x40] sm:$0xf]
      %v262 = vld [vmem:[%s226 + $0x44] sm:$0x1]
      %v263 = vunpack.c.l.bf16 %v245
      %v264 = vunpack.c.l.bf16 %v246
      %v265 = vunpack.c.l.bf16 %v247
      %v266 = vunpack.c.l.bf16 %v248
      %v267 = vunpack.c.l.bf16 %v249
      %v268 = vunpack.c.l.bf16 %v250
      %v269 = vunpack.c.l.bf16 %v251
      %v270 = vunpack.c.l.bf16 %v252
      %v271 = vunpack.c.l.bf16 %v253
      %v272 = vunpack.c.l.bf16 %v254
      %v273 = vunpack.c.l.bf16 %v255
      %v274 = vunpack.c.l.bf16 %v256
      %v275 = vunpack.c.l.bf16 %v257
      %v276 = vunpack.c.l.bf16 %v258
      %v277 = vunpack.c.l.bf16 %v259
      %v278 = vunpack.c.l.bf16 %v260
      %v279 = vunpack.c.l.bf16 %v261
      %v280 = vunpack.c.l.bf16 %v262
      %vm281 = vcmp.gt.f32.partialorder %v263, 0.0
      %vm282 = vcmp.gt.f32.partialorder %v264, 0.0
      %vm283 = vcmp.gt.f32.partialorder %v265, 0.0
      %vm284 = vcmp.gt.f32.partialorder %v266, 0.0
      %vm285 = vcmp.gt.f32.partialorder %v267, 0.0
      %vm286 = vcmp.gt.f32.partialorder %v268, 0.0
      %vm287 = vcmp.gt.f32.partialorder %v269, 0.0
      %vm288 = vcmp.gt.f32.partialorder %v270, 0.0
      %vm289 = vcmp.gt.f32.partialorder %v271, 0.0
      %vm290 = vcmp.gt.f32.partialorder %v272, 0.0
      %vm291 = vcmp.gt.f32.partialorder %v273, 0.0
      %vm292 = vcmp.gt.f32.partialorder %v274, 0.0
      %vm293 = vcmp.gt.f32.partialorder %v275, 0.0
      %vm294 = vcmp.gt.f32.partialorder %v276, 0.0
      %vm295 = vcmp.gt.f32.partialorder %v277, 0.0
      %vm296 = vcmp.gt.f32.partialorder %v278, 0.0
      %vm297 = vcmp.gt.f32.partialorder %v279, 0.0
      %vm298 = vcmp.gt.f32.partialorder %v280, 0.0
      %v299 = vmul.f32 %v263, 0.2
      %v300 = vmul.f32 %v264, 0.2
      %v301 = vmul.f32 %v265, 0.2
      %v302 = vmul.f32 %v266, 0.2
      %v303 = vmul.f32 %v267, 0.2
      %v304 = vmul.f32 %v268, 0.2
      %v305 = vmul.f32 %v269, 0.2
      %v306 = vmul.f32 %v270, 0.2
      %v307 = vmul.f32 %v271, 0.2
      %v308 = vmul.f32 %v272, 0.2
      %v309 = vmul.f32 %v273, 0.2
      %v310 = vmul.f32 %v274, 0.2
      %v311 = vmul.f32 %v275, 0.2
      %v312 = vmul.f32 %v276, 0.2
      %v313 = vmul.f32 %v277, 0.2
      %v314 = vmul.f32 %v278, 0.2
      %v315 = vmul.f32 %v279, 0.2
      %v316 = vmul.f32 %v280, 0.2
      %v317 = vsel %vm281, %v263, %v299
      %v318 = vsel %vm282, %v264, %v300
      %v319 = vsel %vm283, %v265, %v301
      %v320 = vsel %vm284, %v266, %v302
      %v321 = vsel %vm285, %v267, %v303
      %v322 = vsel %vm286, %v268, %v304
      %v323 = vsel %vm287, %v269, %v305
      %v324 = vsel %vm288, %v270, %v306
      %v325 = vsel %vm289, %v271, %v307
      %v326 = vsel %vm290, %v272, %v308
      %v327 = vsel %vm291, %v273, %v309
      %v328 = vsel %vm292, %v274, %v310
      %v329 = vsel %vm293, %v275, %v311
      %v330 = vsel %vm294, %v276, %v312
      %v331 = vsel %vm295, %v277, %v313
      %v332 = vsel %vm296, %v278, %v314
      %v333 = vsel %vm297, %v279, %v315
      %v334 = vsel %vm298, %v280, %v316
      %v335 = vpack.c.bf16 %v318, %v317
      %v336 = vpack.c.bf16 %v320, %v319
      %v337 = vpack.c.bf16 %v322, %v321
      %v338 = vpack.c.bf16 %v324, %v323
      %v339 = vpack.c.bf16 %v326, %v325
      %v340 = vpack.c.bf16 %v328, %v327
      %v341 = vpack.c.bf16 %v330, %v329
      %v342 = vpack.c.bf16 %v332, %v331
      %v343 = vpack.c.bf16 %v334, %v333
      %v344 = vld [vmem:[%s1] sm:$0xf]
      %v345 = vld [vmem:[%s1 + $0x4] sm:$0xf]
      %v354 = vunpack.c.l.b16 %v335
      %v355 = vunpack.c.h.b16 %v335
      %v356 = vunpack.c.l.b16 %v336
      %v357 = vunpack.c.h.b16 %v336
      %v358 = vunpack.c.l.b16 %v337
      %v359 = vunpack.c.h.b16 %v337
      %v360 = vunpack.c.l.b16 %v338
      %v361 = vunpack.c.h.b16 %v338
      %v362 = vunpack.c.l.b16 %v339
      %v363 = vunpack.c.h.b16 %v339
      %v364 = vunpack.c.l.b16 %v340
      %v365 = vunpack.c.h.b16 %v340
      %v366 = vunpack.c.l.b16 %v341
      %v367 = vunpack.c.h.b16 %v341
      %v368 = vunpack.c.l.b16 %v342
      %v369 = vunpack.c.h.b16 %v342
      %v370 = vpack.c.b16 %v354, %v354
      %v371 = vpack.c.b16 %v355, %v355
      %v372 = vpack.c.b16 %v356, %v356
      %v373 = vpack.c.b16 %v357, %v357
      %v374 = vpack.c.b16 %v358, %v358
      %v375 = vpack.c.b16 %v359, %v359
      %v376 = vpack.c.b16 %v360, %v360
      %v377 = vpack.c.b16 %v361, %v361
      %v378 = vpack.c.b16 %v362, %v362
      %v379 = vpack.c.b16 %v363, %v363
      %v380 = vpack.c.b16 %v364, %v364
      %v381 = vpack.c.b16 %v365, %v365
      %v382 = vpack.c.b16 %v366, %v366
      %v383 = vpack.c.b16 %v367, %v367
      %v384 = vpack.c.b16 %v368, %v368
      %v385 = vpack.c.b16 %v369, %v369
      %vm386 = vsmask.f32 3328
      %vm387 = vsmask.f32 7440
      %vm388 = vmor %vm386, %vm387
      %v390 = vshrl.u32 %v370, 16
      %v392 = vrot.slane %v390, 4
      %v393 = vshll.u32 %v370, 16
      %v395 = vrot.slane %v393, 5
      %v396 = vor.u32 %v392, %v395
      %v397 = vrot.slane %v396, 4
      %v399 = vshll.u32 %v371, 16
      %v401 = vrot.slane %v399, 5
      %v402 = vsel %vm388, %v397, %v401
      %v404 = vshrl.u32 %v372, 16
      %v406 = vrot.slane %v404, 4
      %v407 = vshll.u32 %v372, 16
      %v409 = vrot.slane %v407, 5
      %v410 = vor.u32 %v406, %v409
      %v411 = vrot.slane %v410, 4
      %v413 = vshll.u32 %v373, 16
      %v415 = vrot.slane %v413, 5
      %v416 = vsel %vm388, %v411, %v415
      %v418 = vshrl.u32 %v374, 16
      %v420 = vrot.slane %v418, 4
      %v421 = vshll.u32 %v374, 16
      %v423 = vrot.slane %v421, 5
      %v424 = vor.u32 %v420, %v423
      %v425 = vrot.slane %v424, 4
      %v427 = vshll.u32 %v375, 16
      %v429 = vrot.slane %v427, 5
      %v430 = vsel %vm388, %v425, %v429
      %v432 = vshrl.u32 %v376, 16
      %v434 = vrot.slane %v432, 4
      %v435 = vshll.u32 %v376, 16
      %v437 = vrot.slane %v435, 5
      %v438 = vor.u32 %v434, %v437
      %v439 = vrot.slane %v438, 4
      %v441 = vshll.u32 %v377, 16
      %v443 = vrot.slane %v441, 5
      %v444 = vsel %vm388, %v439, %v443
      %v446 = vshrl.u32 %v378, 16
      %v448 = vrot.slane %v446, 4
      %v449 = vshll.u32 %v378, 16
      %v451 = vrot.slane %v449, 5
      %v452 = vor.u32 %v448, %v451
      %v453 = vrot.slane %v452, 4
      %v455 = vshll.u32 %v379, 16
      %v457 = vrot.slane %v455, 5
      %v458 = vsel %vm388, %v453, %v457
      %v460 = vshrl.u32 %v380, 16
      %v462 = vrot.slane %v460, 4
      %v463 = vshll.u32 %v380, 16
      %v465 = vrot.slane %v463, 5
      %v466 = vor.u32 %v462, %v465
      %v467 = vrot.slane %v466, 4
      %v469 = vshll.u32 %v381, 16
      %v471 = vrot.slane %v469, 5
      %v472 = vsel %vm388, %v467, %v471
      %v474 = vshrl.u32 %v382, 16
      %v476 = vrot.slane %v474, 4
      %v477 = vshll.u32 %v382, 16
      %v479 = vrot.slane %v477, 5
      %v480 = vor.u32 %v476, %v479
      %v481 = vrot.slane %v480, 4
      %v483 = vshll.u32 %v383, 16
      %v485 = vrot.slane %v483, 5
      %v486 = vsel %vm388, %v481, %v485
      %v488 = vshrl.u32 %v384, 16
      %v490 = vrot.slane %v488, 4
      %v491 = vshll.u32 %v384, 16
      %v493 = vrot.slane %v491, 5
      %v494 = vor.u32 %v490, %v493
      %v495 = vrot.slane %v494, 4
      %v497 = vshll.u32 %v385, 16
      %v499 = vrot.slane %v497, 5
      %v500 = vsel %vm388, %v495, %v499
      %s501 = scalar_lea.vmem %s1, 8
      %v502 = vld [vmem:[%s501] sm:$0xf]
      %v503 = vld [vmem:[%s501 + $0x4] sm:$0xf]
      %v504 = vunpack.c.l.b16 %v402
      %v505 = vunpack.c.l.b16 %v416
      %v506 = vunpack.c.l.b16 %v430
      %v507 = vunpack.c.l.b16 %v444
      %v508 = vunpack.c.l.b16 %v458
      %v509 = vunpack.c.l.b16 %v472
      %v510 = vunpack.c.l.b16 %v486
      %v511 = vunpack.c.l.b16 %v500
      %v512 = vpack.c.b16 %v505, %v504
      %v513 = vpack.c.b16 %v507, %v506
      %v514 = vpack.c.b16 %v509, %v508
      %v515 = vpack.c.b16 %v511, %v510
      %v518 = vunpack.c.l.b16 %v502
      %v519 = vunpack.c.l.b16 %v503
      %v520 = vpack.c.b16 %v519, %v518
      %vm522 = vcmask 130048
      %v524 = vsel %vm522, %v512, 0
      %v527 = vsel %vm522, %v513, 0
      %v530 = vsel %vm522, %v514, 0
      %v533 = vsel %vm522, %v515, 0
      %535 = vmatprep.subr.bf16.mxu0 0
      %536 = vmatpush1.bf16.msra.mxu0 %v520
      %537 = vmatprep.subr.bf16.mxu0 0
      %538 = vmatpush1.bf16.msra.mxu0 0
      %539 = vmatprep.subr.bf16.mxu0 0
      %540 = vmatpush1.bf16.msra.mxu0 0
      %541 = vmatprep.subr.bf16.mxu0 0
      %542 = vmatpush1.bf16.msra.mxu0 0
      %543 = vmatprep.subr.bf16.mxu0 0
      %544 = vmatpush1.bf16.msra.mxu0 0
      %545 = vmatprep.subr.bf16.mxu0 0
      %546 = vmatpush1.bf16.msra.mxu0 0
      %547 = vmatprep.subr.bf16.mxu0 0
      %548 = vmatpush1.bf16.msra.mxu0 0
      %549 = vmatprep.subr.bf16.mxu0 0
      %550 = vmatpush1.bf16.msra.mxu0 0
      %551 = vmatprep.subr.bf16.mxu0 0
      %552 = vmatpush1.bf16.msra.mxu0 0
      %553 = vmatprep.subr.bf16.mxu0 0
      %554 = vmatpush1.bf16.msra.mxu0 0
      %555 = vmatprep.subr.bf16.mxu0 0
      %556 = vmatpush1.bf16.msra.mxu0 0
      %557 = vmatprep.subr.bf16.mxu0 0
      %558 = vmatpush1.bf16.msra.mxu0 0
      %559 = vmatprep.subr.bf16.mxu0 0
      %560 = vmatpush1.bf16.msra.mxu0 0
      %561 = vmatprep.subr.bf16.mxu0 0
      %562 = vmatpush1.bf16.msra.mxu0 0
      %563 = vmatprep.subr.bf16.mxu0 0
      %564 = vmatpush1.bf16.msra.mxu0 0
      %565 = vmatprep.subr.bf16.mxu0 0
      %566 = vmatpush1.bf16.msra.mxu0 0
      %567 = vmatprep.mubr.bf16.mxu0 0
      %568 = vmatmul.mubr.bf16.gmra.mrb[0].mxu0 %v524
      %v569 = vpop.f32.mrb[0].mxu0
      %v570 = vadd.f32 0.0, %v569
      %v571 = vpop.f32.mrb[0].mxu0
      %v572 = vpop.f32.mrb[0].mxu0
      %v573 = vadd.f32 0.0, %v572
      %v574 = vpop.f32.mrb[0].mxu0
      %575 = vmatprep.mubr.bf16.mxu0 0
      %576 = vmatmul.mubr.bf16.gmra.mrb[0].mxu0 %v527
      %v577 = vpop.f32.mrb[0].mxu0
      %v578 = vadd.f32 0.0, %v577
      %v579 = vpop.f32.mrb[0].mxu0
      %v580 = vpop.f32.mrb[0].mxu0
      %v581 = vadd.f32 0.0, %v580
      %v582 = vpop.f32.mrb[0].mxu0
      %583 = vmatprep.mubr.bf16.mxu0 0
      %584 = vmatmul.mubr.bf16.gmra.mrb[0].mxu0 %v530
      %v585 = vpop.f32.mrb[0].mxu0
      %v586 = vadd.f32 0.0, %v585
      %v587 = vpop.f32.mrb[0].mxu0
      %v588 = vpop.f32.mrb[0].mxu0
      %v589 = vadd.f32 0.0, %v588
      %v590 = vpop.f32.mrb[0].mxu0
      %591 = vmatprep.mubr.bf16.mxu0 0
      %592 = vmatmul.mubr.bf16.gmra.mrb[0].mxu0 %v533
      %v593 = vpop.f32.mrb[0].mxu0
      %v594 = vadd.f32 0.0, %v593
      %v595 = vpop.f32.mrb[0].mxu0
      %v596 = vpop.f32.mrb[0].mxu0
      %v597 = vadd.f32 0.0, %v596
      %v598 = vpop.f32.mrb[0].mxu0
      %599 = vdwg.mxu0
      %v600 = vpack.c.b16 %v356, %v354
      %v601 = vpack.c.b16 %v360, %v358
      %v602 = vpack.c.b16 %v364, %v362
      %v603 = vpack.c.b16 %v368, %v366
      %v606 = vunpack.c.l.b16 %v344
      %v607 = vunpack.c.l.b16 %v345
      %v608 = vpack.c.b16 %v607, %v606
      %v611 = vsel %vm522, %v600, 0
      %v614 = vsel %vm522, %v601, 0
      %v617 = vsel %vm522, %v602, 0
      %v620 = vsel %vm522, %v603, 0
      %622 = vmatprep.subr.bf16.mxu0 0
      %623 = vmatpush1.bf16.msra.mxu0 %v608
      %624 = vmatprep.subr.bf16.mxu0 0
      %625 = vmatpush1.bf16.msra.mxu0 0
      %626 = vmatprep.subr.bf16.mxu0 0
      %627 = vmatpush1.bf16.msra.mxu0 0
      %628 = vmatprep.subr.bf16.mxu0 0
      %629 = vmatpush1.bf16.msra.mxu0 0
      %630 = vmatprep.subr.bf16.mxu0 0
      %631 = vmatpush1.bf16.msra.mxu0 0
      %632 = vmatprep.subr.bf16.mxu0 0
      %633 = vmatpush1.bf16.msra.mxu0 0
      %634 = vmatprep.subr.bf16.mxu0 0
      %635 = vmatpush1.bf16.msra.mxu0 0
      %636 = vmatprep.subr.bf16.mxu0 0
      %637 = vmatpush1.bf16.msra.mxu0 0
      %638 = vmatprep.subr.bf16.mxu0 0
      %639 = vmatpush1.bf16.msra.mxu0 0
      %640 = vmatprep.subr.bf16.mxu0 0
      %641 = vmatpush1.bf16.msra.mxu0 0
      %642 = vmatprep.subr.bf16.mxu0 0
      %643 = vmatpush1.bf16.msra.mxu0 0
      %644 = vmatprep.subr.bf16.mxu0 0
      %645 = vmatpush1.bf16.msra.mxu0 0
      %646 = vmatprep.subr.bf16.mxu0 0
      %647 = vmatpush1.bf16.msra.mxu0 0
      %648 = vmatprep.subr.bf16.mxu0 0
      %649 = vmatpush1.bf16.msra.mxu0 0
      %650 = vmatprep.subr.bf16.mxu0 0
      %651 = vmatpush1.bf16.msra.mxu0 0
      %652 = vmatprep.subr.bf16.mxu0 0
      %653 = vmatpush1.bf16.msra.mxu0 0
      %654 = vmatprep.mubr.bf16.mxu0 0
      %655 = vmatmul.mubr.bf16.gmra.mrb[0].mxu0 %v611
      %v656 = vpop.f32.mrb[0].mxu0
      %v657 = vadd.f32 %v570, %v656
      %v658 = vpop.f32.mrb[0].mxu0
      %v659 = vpop.f32.mrb[0].mxu0
      %v660 = vadd.f32 %v573, %v659
      %v661 = vpop.f32.mrb[0].mxu0
      %662 = vmatprep.mubr.bf16.mxu0 0
      %663 = vmatmul.mubr.bf16.gmra.mrb[0].mxu0 %v614
      %v664 = vpop.f32.mrb[0].mxu0
      %v665 = vadd.f32 %v578, %v664
      %v666 = vpop.f32.mrb[0].mxu0
      %v667 = vpop.f32.mrb[0].mxu0
      %v668 = vadd.f32 %v581, %v667
      %v669 = vpop.f32.mrb[0].mxu0
      %670 = vmatprep.mubr.bf16.mxu0 0
      %671 = vmatmul.mubr.bf16.gmra.mrb[0].mxu0 %v617
      %v672 = vpop.f32.mrb[0].mxu0
      %v673 = vadd.f32 %v586, %v672
      %v674 = vpop.f32.mrb[0].mxu0
      %v675 = vpop.f32.mrb[0].mxu0
      %v676 = vadd.f32 %v589, %v675
      %v677 = vpop.f32.mrb[0].mxu0
      %678 = vmatprep.mubr.bf16.mxu0 0
      %679 = vmatmul.mubr.bf16.gmra.mrb[0].mxu0 %v620
      %v680 = vpop.f32.mrb[0].mxu0
      %v681 = vadd.f32 %v594, %v680
      %v682 = vpop.f32.mrb[0].mxu0
      %v683 = vpop.f32.mrb[0].mxu0
      %v684 = vadd.f32 %v597, %v683
      %v685 = vpop.f32.mrb[0].mxu0
      %686 = vdwg.mxu0
      %s687 = scalar_lea.vmem %s1, 16
      %v688 = vld [vmem:[%s687] sm:$0xf]
      %v689 = vld [vmem:[%s687 + $0x4] sm:$0xf]
      %v691 = vunpack.c.l.b16 %v343
      %v692 = vpack.c.b16 %v358, %v356
      %v693 = vpack.c.b16 %v362, %v360
      %v694 = vpack.c.b16 %v366, %v364
      %v695 = vpack.c.b16 %v691, %v368
      %v698 = vunpack.c.l.b16 %v688
      %v699 = vunpack.c.l.b16 %v689
      %v700 = vpack.c.b16 %v699, %v698
      %v703 = vsel %vm522, %v692, 0
      %v706 = vsel %vm522, %v693, 0
      %v709 = vsel %vm522, %v694, 0
      %v712 = vsel %vm522, %v695, 0
      %714 = vmatprep.subr.bf16.mxu0 0
      %715 = vmatpush1.bf16.msra.mxu0 %v700
      %716 = vmatprep.subr.bf16.mxu0 0
      %717 = vmatpush1.bf16.msra.mxu0 0
      %718 = vmatprep.subr.bf16.mxu0 0
      %719 = vmatpush1.bf16.msra.mxu0 0
      %720 = vmatprep.subr.bf16.mxu0 0
      %721 = vmatpush1.bf16.msra.mxu0 0
      %722 = vmatprep.subr.bf16.mxu0 0
      %723 = vmatpush1.bf16.msra.mxu0 0
      %724 = vmatprep.subr.bf16.mxu0 0
      %725 = vmatpush1.bf16.msra.mxu0 0
      %726 = vmatprep.subr.bf16.mxu0 0
      %727 = vmatpush1.bf16.msra.mxu0 0
      %728 = vmatprep.subr.bf16.mxu0 0
      %729 = vmatpush1.bf16.msra.mxu0 0
      %730 = vmatprep.subr.bf16.mxu0 0
      %731 = vmatpush1.bf16.msra.mxu0 0
      %732 = vmatprep.subr.bf16.mxu0 0
      %733 = vmatpush1.bf16.msra.mxu0 0
      %734 = vmatprep.subr.bf16.mxu0 0
      %735 = vmatpush1.bf16.msra.mxu0 0
      %736 = vmatprep.subr.bf16.mxu0 0
      %737 = vmatpush1.bf16.msra.mxu0 0
      %738 = vmatprep.subr.bf16.mxu0 0
      %739 = vmatpush1.bf16.msra.mxu0 0
      %740 = vmatprep.subr.bf16.mxu0 0
      %741 = vmatpush1.bf16.msra.mxu0 0
      %742 = vmatprep.subr.bf16.mxu0 0
      %743 = vmatpush1.bf16.msra.mxu0 0
      %744 = vmatprep.subr.bf16.mxu0 0
      %745 = vmatpush1.bf16.msra.mxu0 0
      %746 = vmatprep.mubr.bf16.mxu0 0
      %747 = vmatmul.mubr.bf16.gmra.mrb[0].mxu0 %v703
      %v748 = vpop.f32.mrb[0].mxu0
      %v749 = vadd.f32 0.0, %v748
      %v750 = vpop.f32.mrb[0].mxu0
      %v751 = vpop.f32.mrb[0].mxu0
      %v752 = vadd.f32 0.0, %v751
      %v753 = vpop.f32.mrb[0].mxu0
      %754 = vmatprep.mubr.bf16.mxu0 0
      %755 = vmatmul.mubr.bf16.gmra.mrb[0].mxu0 %v706
      %v756 = vpop.f32.mrb[0].mxu0
      %v757 = vadd.f32 0.0, %v756
      %v758 = vpop.f32.mrb[0].mxu0
      %v759 = vpop.f32.mrb[0].mxu0
      %v760 = vadd.f32 0.0, %v759
      %v761 = vpop.f32.mrb[0].mxu0
      %762 = vmatprep.mubr.bf16.mxu0 0
      %763 = vmatmul.mubr.bf16.gmra.mrb[0].mxu0 %v709
      %v764 = vpop.f32.mrb[0].mxu0
      %v765 = vadd.f32 0.0, %v764
      %v766 = vpop.f32.mrb[0].mxu0
      %v767 = vpop.f32.mrb[0].mxu0
      %v768 = vadd.f32 0.0, %v767
      %v769 = vpop.f32.mrb[0].mxu0
      %770 = vmatprep.mubr.bf16.mxu0 0
      %771 = vmatmul.mubr.bf16.gmra.mrb[0].mxu0 %v712
      %v772 = vpop.f32.mrb[0].mxu0
      %v773 = vadd.f32 0.0, %v772
      %v774 = vpop.f32.mrb[0].mxu0
      %v775 = vpop.f32.mrb[0].mxu0
      %v776 = vadd.f32 0.0, %v775
      %v777 = vpop.f32.mrb[0].mxu0
      %778 = vdwg.mxu0
      %v779 = vadd.f32 %v657, %v749
      %v780 = vadd.f32 %v660, %v752
      %v781 = vadd.f32 %v665, %v757
      %v782 = vadd.f32 %v668, %v760
      %v783 = vadd.f32 %v673, %v765
      %v784 = vadd.f32 %v676, %v768
      %v785 = vadd.f32 %v681, %v773
      %v786 = vadd.f32 %v684, %v776
      %v787 = vunpack.c.h.b16 %v343
      %v788 = vpack.c.b16 %v691, %v691
      %v789 = vpack.c.b16 %v787, %v787
      %v791 = vshrl.u32 %v788, 16
      %v793 = vrot.slane %v791, 4
      %v794 = vshll.u32 %v788, 16
      %v796 = vrot.slane %v794, 5
      %v797 = vor.u32 %v793, %v796
      %v798 = vrot.slane %v797, 4
      %v800 = vshll.u32 %v789, 16
      %v802 = vrot.slane %v800, 5
      %v803 = vsel %vm388, %v798, %v802
      %s804 = scalar_lea.vmem %s1, 24
      %v805 = vld [vmem:[%s804] sm:$0xf]
      %v806 = vld [vmem:[%s804 + $0x4] sm:$0xf]
      %v807 = vunpack.c.l.b16 %v803
      %v808 = vpack.c.b16 %v506, %v505
      %v809 = vpack.c.b16 %v508, %v507
      %v810 = vpack.c.b16 %v510, %v509
      %v811 = vpack.c.b16 %v807, %v511
      %v814 = vunpack.c.l.b16 %v805
      %v815 = vunpack.c.l.b16 %v806
      %v816 = vpack.c.b16 %v815, %v814
      %v819 = vsel %vm522, %v808, 0
      %v822 = vsel %vm522, %v809, 0
      %v825 = vsel %vm522, %v810, 0
      %v828 = vsel %vm522, %v811, 0
      %830 = vmatprep.subr.bf16.mxu0 0
      %831 = vmatpush1.bf16.msra.mxu0 %v816
      %832 = vmatprep.subr.bf16.mxu0 0
      %833 = vmatpush1.bf16.msra.mxu0 0
      %834 = vmatprep.subr.bf16.mxu0 0
      %835 = vmatpush1.bf16.msra.mxu0 0
      %836 = vmatprep.subr.bf16.mxu0 0
      %837 = vmatpush1.bf16.msra.mxu0 0
      %838 = vmatprep.subr.bf16.mxu0 0
      %839 = vmatpush1.bf16.msra.mxu0 0
      %840 = vmatprep.subr.bf16.mxu0 0
      %841 = vmatpush1.bf16.msra.mxu0 0
      %842 = vmatprep.subr.bf16.mxu0 0
      %843 = vmatpush1.bf16.msra.mxu0 0
      %844 = vmatprep.subr.bf16.mxu0 0
      %845 = vmatpush1.bf16.msra.mxu0 0
      %846 = vmatprep.subr.bf16.mxu0 0
      %847 = vmatpush1.bf16.msra.mxu0 0
      %848 = vmatprep.subr.bf16.mxu0 0
      %849 = vmatpush1.bf16.msra.mxu0 0
      %850 = vmatprep.subr.bf16.mxu0 0
      %851 = vmatpush1.bf16.msra.mxu0 0
      %852 = vmatprep.subr.bf16.mxu0 0
      %853 = vmatpush1.bf16.msra.mxu0 0
      %854 = vmatprep.subr.bf16.mxu0 0
      %855 = vmatpush1.bf16.msra.mxu0 0
      %856 = vmatprep.subr.bf16.mxu0 0
      %857 = vmatpush1.bf16.msra.mxu0 0
      %858 = vmatprep.subr.bf16.mxu0 0
      %859 = vmatpush1.bf16.msra.mxu0 0
      %860 = vmatprep.subr.bf16.mxu0 0
      %861 = vmatpush1.bf16.msra.mxu0 0
      %862 = vmatprep.mubr.bf16.mxu0 0
      %863 = vmatmul.mubr.bf16.gmra.mrb[0].mxu0 %v819
      %v864 = vpop.f32.mrb[0].mxu0
      %v865 = vadd.f32 0.0, %v864
      %v866 = vpop.f32.mrb[0].mxu0
      %v867 = vpop.f32.mrb[0].mxu0
      %v868 = vadd.f32 0.0, %v867
      %v869 = vpop.f32.mrb[0].mxu0
      %870 = vmatprep.mubr.bf16.mxu0 0
      %871 = vmatmul.mubr.bf16.gmra.mrb[0].mxu0 %v822
      %v872 = vpop.f32.mrb[0].mxu0
      %v873 = vadd.f32 0.0, %v872
      %v874 = vpop.f32.mrb[0].mxu0
      %v875 = vpop.f32.mrb[0].mxu0
      %v876 = vadd.f32 0.0, %v875
      %v877 = vpop.f32.mrb[0].mxu0
      %878 = vmatprep.mubr.bf16.mxu0 0
      %879 = vmatmul.mubr.bf16.gmra.mrb[0].mxu0 %v825
      %v880 = vpop.f32.mrb[0].mxu0
      %v881 = vadd.f32 0.0, %v880
      %v882 = vpop.f32.mrb[0].mxu0
      %v883 = vpop.f32.mrb[0].mxu0
      %v884 = vadd.f32 0.0, %v883
      %v885 = vpop.f32.mrb[0].mxu0
      %886 = vmatprep.mubr.bf16.mxu0 0
      %887 = vmatmul.mubr.bf16.gmra.mrb[0].mxu0 %v828
      %v888 = vpop.f32.mrb[0].mxu0
      %v889 = vadd.f32 0.0, %v888
      %v890 = vpop.f32.mrb[0].mxu0
      %v891 = vpop.f32.mrb[0].mxu0
      %v892 = vadd.f32 0.0, %v891
      %v893 = vpop.f32.mrb[0].mxu0
      %894 = vdwg.mxu0
      %v895 = vadd.f32 %v779, %v865
      %v896 = vadd.f32 %v780, %v868
      %v897 = vadd.f32 %v781, %v873
      %v898 = vadd.f32 %v782, %v876
      %v899 = vadd.f32 %v783, %v881
      %v900 = vadd.f32 %v784, %v884
      %v901 = vadd.f32 %v785, %v889
      %v902 = vadd.f32 %v786, %v892
      %903 = vst [vmem:[%s233] sm:$0xff] %v895
      %904 = vst [vmem:[%s233 + $0x8] sm:$0xff] %v896
      %905 = vst [vmem:[%s233 + $0x10] sm:$0xff] %v897
      %906 = vst [vmem:[%s233 + $0x18] sm:$0xff] %v898
      %907 = vst [vmem:[%s233 + $0x20] sm:$0xff] %v899
      %908 = vst [vmem:[%s233 + $0x28] sm:$0xff] %v900
      %909 = vst [vmem:[%s233 + $0x30] sm:$0xff] %v901
      %910 = vst [vmem:[%s233 + $0x38] sm:$0xff] %v902
      %p911 = scmp.eq.s32.totalorder %s21, 0
      // Predicated region
      $region29: #{block_unet_forward.2} parent=27 // pred_check
        %p912 = pneg %p911
      $region30: #{block_unet_forward.2} parent=27 // pred_check_branch
        %914 = sbr.rel (%p912) target = $region32
      $region31: #{block_unet_forward.2} parent=27 // pred_region
        %915 = vst [vmem:[%s239] sm:$0xff] 0.0
        %916 = vst [vmem:[%s243] sm:$0xff] 0.0
      $region32: #{block_unet_forward.2} parent=27 // pred_fallthru
        _
      %v917 = vld [vmem:[%s239] sm:$0xff]
      %v918 = vadd.f32 %v895, %v896
      %v919 = vadd.f32 %v918, %v897
      %v920 = vadd.f32 %v919, %v898
      %v921 = vadd.f32 %v920, %v899
      %v922 = vadd.f32 %v921, %v900
      %v923 = vadd.f32 %v922, %v901
      %v924 = vadd.f32 %v923, %v902
      %v925 = vadd.f32 %v917, %v924
      %926 = vst [vmem:[%s239] sm:$0xff] %v925
      %v927 = vld [vmem:[%s243] sm:$0xff]
      %v928 = vmul.f32 %v895, %v895
      %v929 = vmul.f32 %v896, %v896
      %v930 = vmul.f32 %v897, %v897
      %v931 = vmul.f32 %v898, %v898
      %v932 = vmul.f32 %v899, %v899
      %v933 = vmul.f32 %v900, %v900
      %v934 = vmul.f32 %v901, %v901
      %v935 = vmul.f32 %v902, %v902
      %v936 = vadd.f32 %v928, %v929
      %v937 = vadd.f32 %v936, %v930
      %v938 = vadd.f32 %v937, %v931
      %v939 = vadd.f32 %v938, %v932
      %v940 = vadd.f32 %v939, %v933
      %v941 = vadd.f32 %v940, %v934
      %v942 = vadd.f32 %v941, %v935
      %v943 = vadd.f32 %v927, %v942
      %944 = vst [vmem:[%s243] sm:$0xff] %v943
      %s945 = sadd.s32 %s20, %s21
      %s946 = smul.u32 8, %s945
      %p947 = scmp.lt.s32.totalorder %s946, 15
      %s948 = scalar_select %p947, %s946, 15
      %s949 = smul.addr %s948, 8
      %s950 = scalar_lea.vmem %s2, %s949
      %p951 = scmp.lt.s32.totalorder %s20, 1
      %s952 = scalar_select %p951, %s20, 1
      %s953 = smul.addr %s952, 8
      %s954 = scalar_lea.vmem %s3, %s953
      %p955 = scmp.lt.s32.totalorder %s20, 1
      %s956 = scalar_select %p955, %s20, 1
      %s957 = smul.addr %s956, 8
      %s958 = scalar_lea.vmem %s4, %s957
      // Predicated region
      $region33: #{block_unet_forward.2} parent=27 // pred_check
        %p959 = pneg %p97
      $region34: #{block_unet_forward.2} parent=27 // pred_check_branch
        %961 = sbr.rel (%p959) target = $region36
      $region35: #{block_unet_forward.2} parent=27 // pred_region
        %s962 = sadd.s32 %s20, %s21
        %s963 = smul.u32 8, %s962
      $region36: #{block_unet_forward.2} parent=27 // pred_fallthru
        _
      // Predicated region
      $region37: #{block_unet_forward.2} parent=27 // pred_check
        %p964 = pneg %p123
      $region38: #{block_unet_forward.2} parent=27 // pred_check_branch
        %966 = sbr.rel (%p964) target = $region40
      $region39: #{block_unet_forward.2} parent=27 // pred_region
        _
      $region40: #{block_unet_forward.2} parent=27 // pred_fallthru
        _
      // Predicated region
      $region41: #{block_unet_forward.2} parent=27 // pred_check
        %p967 = pneg %p149
      $region42: #{block_unet_forward.2} parent=27 // pred_check_branch
        %969 = sbr.rel (%p967) target = $region44
      $region43: #{block_unet_forward.2} parent=27 // pred_region
        _
      $region44: #{block_unet_forward.2} parent=27 // pred_fallthru
        _
    $region28: #{block_unet_forward.2} parent=5 // pred_fallthru
      _
    %p970 = scmp.le.s32.totalorder 2, %s11
    // Predicated region
    $region45: #{block_unet_forward.2} parent=5 // pred_check
      %p971 = pneg %p970
    $region46: #{block_unet_forward.2} parent=5 // pred_check_branch
      %973 = sbr.rel (%p971) target = $region48
    $region47: #{block_unet_forward.2} parent=5 // pred_region
      %s974 = ssub.s32 %s11, 2
      // Predicated region
      $region49: #{block_unet_forward.2} parent=47 // pred_check
        %p975 = pneg %p103
      $region50: #{block_unet_forward.2} parent=47 // pred_check_branch
        %977 = sbr.rel (%p975) target = $region52
      $region51: #{block_unet_forward.2} parent=47 // pred_region
        %s978 = sadd.s32 %s22, %s23
        %s979 = smul.u32 8, %s978
        %p980 = scmp.lt.s32.totalorder %s979, 15
        %s981 = scalar_select %p980, %s979, 15
        %s982 = smul.addr %s981, 8
        %s983 = scalar_lea.vmem %s2, %s982
      $region52: #{block_unet_forward.2} parent=47 // pred_fallthru
        _
      // Predicated region
      $region53: #{block_unet_forward.2} parent=47 // pred_check
        %p984 = pneg %p129
      $region54: #{block_unet_forward.2} parent=47 // pred_check_branch
        %986 = sbr.rel (%p984) target = $region56
      $region55: #{block_unet_forward.2} parent=47 // pred_region
        %p987 = scmp.lt.s32.totalorder %s22, 1
        %s988 = scalar_select %p987, %s22, 1
        %s989 = smul.addr %s988, 8
        %s990 = scalar_lea.vmem %s3, %s989
      $region56: #{block_unet_forward.2} parent=47 // pred_fallthru
        _
      // Predicated region
      $region57: #{block_unet_forward.2} parent=47 // pred_check
        %p991 = pneg %p155
      $region58: #{block_unet_forward.2} parent=47 // pred_check_branch
        %993 = sbr.rel (%p991) target = $region60
      $region59: #{block_unet_forward.2} parent=47 // pred_region
        %p994 = scmp.lt.s32.totalorder %s22, 1
        %s995 = scalar_select %p994, %s22, 1
        %s996 = smul.addr %s995, 8
        %s997 = scalar_lea.vmem %s4, %s996
      $region60: #{block_unet_forward.2} parent=47 // pred_fallthru
        _
    $region48: #{block_unet_forward.2} parent=5 // pred_fallthru
      _
  $region6: #{block_unet_forward.2} parent=0 // loop_footer
    %s15 = sadd.s32 1, %s11
  $region7: #{block_unet_forward.2} parent=0 // loop_footer_branch
    %10 = sbr.rel target = $region3
  $region8: #{block_unet_forward.2} parent=0 // loop_exit
    _

</llo_original>
